<compile_context>
chip_gen: v5e
topology: v5e:2x2
jax: 0.10.0
libtpu: 0.0.40
codegen_flags: <defaults>
</compile_context>

<pallas_src>
import functools
import numpy as np
import jax
import jax.numpy as jnp
from jax.experimental import pallas as pl
from jax.experimental.pallas import tpu as pltpu


def _attn_kernel(x_ref, wq_ref, wk_ref, wv_ref, wp_ref, bp_ref, o_ref, *, num_heads):
    # x_ref:  (1, N, C) f32
    # wq/wk/wv_ref: (C_out, C_in) bf16  (softmax scale pre-folded into wq)
    # wp_ref: (C_in, C_out) bf16        bp_ref: (1, C) f32        o_ref: (1, N, C)
    _, N, C = x_ref.shape
    H = num_heads
    hd = C // H

    x = x_ref[0].astype(jnp.bfloat16)                        # (N, C)

    # Full-width projections (K = C on the MXU), emitted channel-major so that the
    # per-head split below is a free sublane-dim reshape (hd is a multiple of 8).
    # 'oc,nc->on' is dot_general's natural output order: no in-kernel transposes.
    def project_t(w_ref):                                     # -> (C, N) f32
        return jnp.einsum('oc,nc->on', w_ref[...], x,
                          preferred_element_type=jnp.float32)

    qT = project_t(wq_ref)          # scale already folded into wq
    kT = project_t(wk_ref)
    vT = project_t(wv_ref)

    def heads(t):                                             # (C, N) -> (H, hd, N), free
        return t.reshape(H, hd, N).astype(jnp.bfloat16)

    qh, kh, vh = heads(qT), heads(kT), heads(vT)

    # Scores + softmax in f32 (max-subtracted); probabilities back to bf16 for the MXU.
    s = jnp.einsum('hdi,hdj->hij', qh, kh,
                   preferred_element_type=jnp.float32)        # (H, N, N)
    s = s - jnp.max(s, axis=-1, keepdims=True)
    p = jnp.exp(s)
    p = p * pl.reciprocal(jnp.sum(p, axis=-1, keepdims=True), approx=True)
    pb = p.astype(jnp.bfloat16)

    # attn @ v, channel-major output; heads merge back into C for free.
    ohT = jnp.einsum('hdj,hij->hdi', vh, pb,
                     preferred_element_type=jnp.float32)      # (H, hd, N)
    ohT = ohT.reshape(C, N).astype(jnp.bfloat16)              # (C, N)

    # Fused "concat heads + output projection": one K = C contraction, so the head
    # reduction happens inside the MXU accumulation (no (H, N, C) intermediate).
    y = jnp.einsum('ci,co->io', ohT, wp_ref[...],
                   preferred_element_type=jnp.float32)        # (N, C), lane-dense store
    o_ref[0] = (y + bp_ref[...]).astype(o_ref.dtype)


def prepare_attention_params(params, *, num_heads, dtype=jnp.bfloat16):
    """One-time weight prep (call once and cache; NOT part of the per-forward path):
    split the fused qkv weight, fold the softmax scale into W_q, cast weights to bf16."""
    w_qkv = params["w_qkv"]            # (3C, C), PyTorch (out, in) layout
    w_proj = params["w_proj"]          # (C, C),  PyTorch (out, in) layout
    b_proj = params["b_proj"]          # (C,)
    three_c, C = w_qkv.shape
    assert three_c == 3 * C and C % num_heads == 0
    hd = C // num_heads
    scale = hd ** -0.5
    wq, wk, wv = w_qkv[:C], w_qkv[C:2 * C], w_qkv[2 * C:]
    return {
        "wq": (wq * scale).astype(dtype),   # (C_out, C_in), scale folded in
        "wk": wk.astype(dtype),
        "wv": wv.astype(dtype),
        "wp_t": w_proj.T.astype(dtype),     # (C_in, C_out)
        "bp": b_proj.reshape(1, C).astype(jnp.float32),
    }


def attention_forward(x, prep, *, num_heads, vmem_limit_bytes=48 * 1024 * 1024):
    """x: (B, N, C) f32; prep: output of prepare_attention_params (cached)."""
    B, N, C = x.shape
    assert C % num_heads == 0
    hd = C // num_heads
    assert hd % 8 == 0, "head_dim must be a multiple of 8 for the free in-kernel head split"

    kernel = functools.partial(_attn_kernel, num_heads=num_heads)
    const2 = lambda shape: pl.BlockSpec(shape, lambda b: (0, 0))

    # NOTE: for very long sequences (N*N*H*4 bytes near the VMEM budget, esp. v7x 64 MiB),
    # add a q-tile grid axis with a flash-style online softmax; not needed at these shapes.
    return pl.pallas_call(
        kernel,
        out_shape=jax.ShapeDtypeStruct((B, N, C), x.dtype),
        grid_spec=pltpu.PrefetchScalarGridSpec(
            num_scalar_prefetch=0,
            grid=(B,),                                           # batch sharded across TCs
            in_specs=[
                pl.BlockSpec((1, N, C), lambda b: (b, 0, 0)),    # x
                const2((C, C)),                                  # Wq (scaled, bf16)
                const2((C, C)),                                  # Wk
                const2((C, C)),                                  # Wv
                const2((C, C)),                                  # Wproj^T
                const2((1, C)),                                  # proj bias (f32)
            ],
            out_specs=pl.BlockSpec((1, N, C), lambda b: (b, 0, 0)),
        ),
        compiler_params=pltpu.CompilerParams(
            dimension_semantics=("parallel",),
            vmem_limit_bytes=vmem_limit_bytes,
        ),
    )(x, prep["wq"], prep["wk"], prep["wv"], prep["wp_t"], prep["bp"])


def _reference(x, params, *, num_heads):
    """Pure-JAX f32 reference reproducing the PyTorch Attention.forward exactly."""
    B, N, C = x.shape
    hd = C // num_heads
    scale = hd ** -0.5
    qkv = x @ params["w_qkv"].T                                  # (B, N, 3C)
    qkv = qkv.reshape(B, N, 3, num_heads, hd).transpose(2, 0, 3, 1, 4)
    q, k, v = qkv[0], qkv[1], qkv[2]
    attn = jax.nn.softmax(jnp.einsum('bhqd,bhkd->bhqk', q * scale, k), axis=-1)
    o = jnp.einsum('bhqk,bhkd->bhqd', attn, v)
    o = o.transpose(0, 2, 1, 3).reshape(B, N, C)
    return o @ params["w_proj"].T + params["b_proj"]


if __name__ == "__main__":
    # Small config consistent with the module: dim=32, num_heads=4, seq=8, batch=2.
    B, N, C = 2, 8, 32
    num_heads = 4

    key = jax.random.PRNGKey(0)
    kx, k1, k2, k3 = jax.random.split(key, 4)

    x = jax.random.normal(kx, (B, N, C), dtype=jnp.float32)

    # Parameters in PyTorch layout: fused qkv weight (3C, C), proj weight (C, C), proj bias.
    # qkv_bias=False (module default) -> no QKV bias; the proj Linear has a bias.
    w_scale = C ** -0.5
    params = {
        "w_qkv": w_scale * jax.random.normal(k1, (3 * C, C), jnp.float32),
        "w_proj": w_scale * jax.random.normal(k2, (C, C), jnp.float32),
        "b_proj": 0.02 * jax.random.normal(k3, (C,), jnp.float32),
    }

    prep = prepare_attention_params(params, num_heads=num_heads)   # one-time, cache this
    out = attention_forward(x, prep, num_heads=num_heads)
    out = jax.block_until_ready(out)

    ref = _reference(x, params, num_heads=num_heads)
    # bf16 MXU matmuls + approx reciprocal vs. f32 reference -> relaxed tolerance.
    np.testing.assert_allclose(np.asarray(out), np.asarray(ref), rtol=5e-2, atol=5e-2)

    print("KERNEL_OK")
</pallas_src>

<mosaic_0001>
module attributes {stable_mosaic.version = 11 : i64} {
  func.func @_attn_kernel(%arg0: i32, %arg1: memref<1x8x32xf32, #tpu.memory_space<vmem>>, %arg2: memref<32x32xbf16, #tpu.memory_space<vmem>>, %arg3: memref<32x32xbf16, #tpu.memory_space<vmem>>, %arg4: memref<32x32xbf16, #tpu.memory_space<vmem>>, %arg5: memref<32x32xbf16, #tpu.memory_space<vmem>>, %arg6: memref<1x32xf32, #tpu.memory_space<vmem>>, %arg7: memref<1x8x32xf32, #tpu.memory_space<vmem>>) attributes {dimension_semantics = [#tpu.dimension_semantics<parallel>], iteration_bounds = array<i64: 2>, scalar_prefetch = 0 : i64, scratch_operands = 0 : i64, tpu.core_type = #tpu.core_type<tc>, window_params = [{transform_indices = @transform_0, window_bounds = array<i64: 1, 8, 32>}, {pipeline_mode = #tpu.pipeline_mode<synchronous>, transform_indices = @transform_1, window_bounds = array<i64: 32, 32>}, {pipeline_mode = #tpu.pipeline_mode<synchronous>, transform_indices = @transform_2, window_bounds = array<i64: 32, 32>}, {pipeline_mode = #tpu.pipeline_mode<synchronous>, transform_indices = @transform_3, window_bounds = array<i64: 32, 32>}, {pipeline_mode = #tpu.pipeline_mode<synchronous>, transform_indices = @transform_4, window_bounds = array<i64: 32, 32>}, {pipeline_mode = #tpu.pipeline_mode<synchronous>, transform_indices = @transform_5, window_bounds = array<i64: 1, 32>}, {transform_indices = @transform_6, window_bounds = array<i64: 1, 8, 32>}]} {
    %c0 = arith.constant 0 : index
    %c0_0 = arith.constant 0 : index
    %c0_1 = arith.constant 0 : index
    %0 = vector.load %arg1[%c0, %c0_0, %c0_1] : memref<1x8x32xf32, #tpu.memory_space<vmem>>, vector<1x8x32xf32>
    %1 = vector.shape_cast %0 : vector<1x8x32xf32> to vector<8x32xf32>
    %2 = arith.truncf %1 : vector<8x32xf32> to vector<8x32xbf16>
    %c0_2 = arith.constant 0 : index
    %c0_3 = arith.constant 0 : index
    %3 = vector.load %arg2[%c0_2, %c0_3] : memref<32x32xbf16, #tpu.memory_space<vmem>>, vector<32x32xbf16>
    "tpu.trace_start"() <{level = 10 : i32, message = "oc,nc->on"}> : () -> ()
    %cst = arith.constant dense<0.000000e+00> : vector<32x8xf32>
    %4 = tpu.matmul %3, %2, %cst {dimension_numbers = #tpu.dot_dimension_numbers<[1], [1], [0], [0], [0, 0, 1, 0], [], []>} : vector<32x32xbf16>, vector<8x32xbf16>, vector<32x8xf32> -> vector<32x8xf32>
    "tpu.trace_stop"() : () -> ()
    %c0_4 = arith.constant 0 : index
    %c0_5 = arith.constant 0 : index
    %5 = vector.load %arg3[%c0_4, %c0_5] : memref<32x32xbf16, #tpu.memory_space<vmem>>, vector<32x32xbf16>
    "tpu.trace_start"() <{level = 10 : i32, message = "oc,nc->on"}> : () -> ()
    %cst_6 = arith.constant dense<0.000000e+00> : vector<32x8xf32>
    %6 = tpu.matmul %5, %2, %cst_6 {dimension_numbers = #tpu.dot_dimension_numbers<[1], [1], [0], [0], [0, 0, 1, 0], [], []>} : vector<32x32xbf16>, vector<8x32xbf16>, vector<32x8xf32> -> vector<32x8xf32>
    "tpu.trace_stop"() : () -> ()
    %c0_7 = arith.constant 0 : index
    %c0_8 = arith.constant 0 : index
    %7 = vector.load %arg4[%c0_7, %c0_8] : memref<32x32xbf16, #tpu.memory_space<vmem>>, vector<32x32xbf16>
    "tpu.trace_start"() <{level = 10 : i32, message = "oc,nc->on"}> : () -> ()
    %cst_9 = arith.constant dense<0.000000e+00> : vector<32x8xf32>
    %8 = tpu.matmul %7, %2, %cst_9 {dimension_numbers = #tpu.dot_dimension_numbers<[1], [1], [0], [0], [0, 0, 1, 0], [], []>} : vector<32x32xbf16>, vector<8x32xbf16>, vector<32x8xf32> -> vector<32x8xf32>
    "tpu.trace_stop"() : () -> ()
    %9 = vector.shape_cast %4 : vector<32x8xf32> to vector<4x8x8xf32>
    %10 = arith.truncf %9 : vector<4x8x8xf32> to vector<4x8x8xbf16>
    %11 = vector.shape_cast %6 : vector<32x8xf32> to vector<4x8x8xf32>
    %12 = arith.truncf %11 : vector<4x8x8xf32> to vector<4x8x8xbf16>
    %13 = vector.shape_cast %8 : vector<32x8xf32> to vector<4x8x8xf32>
    %14 = arith.truncf %13 : vector<4x8x8xf32> to vector<4x8x8xbf16>
    "tpu.trace_start"() <{level = 10 : i32, message = "hdi,hdj->hij"}> : () -> ()
    %cst_10 = arith.constant dense<0.000000e+00> : vector<4x8x8xf32>
    %15 = tpu.matmul %10, %12, %cst_10 {dimension_numbers = #tpu.dot_dimension_numbers<[1], [1], [2], [2], [0, 0, 0, 2, 1, 2], [0], [0]>} : vector<4x8x8xbf16>, vector<4x8x8xbf16>, vector<4x8x8xf32> -> vector<4x8x8xf32>
    "tpu.trace_stop"() : () -> ()
    %cst_11 = arith.constant dense<0xFF800000> : vector<4x8xf32>
    %16 = vector.multi_reduction <maximumf>, %15, %cst_11 [2] : vector<4x8x8xf32> to vector<4x8xf32>
    %17 = vector.shape_cast %16 : vector<4x8xf32> to vector<4x8x1xf32>
    %18 = vector.broadcast %17 : vector<4x8x1xf32> to vector<4x8x8xf32>
    %19 = arith.subf %15, %18 : vector<4x8x8xf32>
    %20 = math.exp %19 : vector<4x8x8xf32>
    %cst_12 = arith.constant dense<0.000000e+00> : vector<4x8xf32>
    %21 = vector.multi_reduction <add>, %20, %cst_12 [2] : vector<4x8x8xf32> to vector<4x8xf32>
    %22 = vector.shape_cast %21 : vector<4x8xf32> to vector<4x8x1xf32>
    %23 = tpu.reciprocal %22 {approx = true} : vector<4x8x1xf32> -> vector<4x8x1xf32>
    %24 = vector.broadcast %23 : vector<4x8x1xf32> to vector<4x8x8xf32>
    %25 = arith.mulf %20, %24 : vector<4x8x8xf32>
    %26 = arith.truncf %25 : vector<4x8x8xf32> to vector<4x8x8xbf16>
    "tpu.trace_start"() <{level = 10 : i32, message = "hdj,hij->hdi"}> : () -> ()
    %cst_13 = arith.constant dense<0.000000e+00> : vector<4x8x8xf32>
    %27 = tpu.matmul %14, %26, %cst_13 {dimension_numbers = #tpu.dot_dimension_numbers<[2], [2], [1], [1], [0, 0, 0, 1, 1, 1], [0], [0]>} : vector<4x8x8xbf16>, vector<4x8x8xbf16>, vector<4x8x8xf32> -> vector<4x8x8xf32>
    "tpu.trace_stop"() : () -> ()
    %28 = vector.shape_cast %27 : vector<4x8x8xf32> to vector<32x8xf32>
    %29 = arith.truncf %28 : vector<32x8xf32> to vector<32x8xbf16>
    %c0_14 = arith.constant 0 : index
    %c0_15 = arith.constant 0 : index
    %30 = vector.load %arg5[%c0_14, %c0_15] : memref<32x32xbf16, #tpu.memory_space<vmem>>, vector<32x32xbf16>
    "tpu.trace_start"() <{level = 10 : i32, message = "ci,co->io"}> : () -> ()
    %cst_16 = arith.constant dense<0.000000e+00> : vector<8x32xf32>
    %31 = tpu.matmul %29, %30, %cst_16 {dimension_numbers = #tpu.dot_dimension_numbers<[0], [0], [1], [1], [0, 1, 1, 1], [], []>} : vector<32x8xbf16>, vector<32x32xbf16>, vector<8x32xf32> -> vector<8x32xf32>
    "tpu.trace_stop"() : () -> ()
    %c0_17 = arith.constant 0 : index
    %c0_18 = arith.constant 0 : index
    %32 = vector.load %arg6[%c0_17, %c0_18] : memref<1x32xf32, #tpu.memory_space<vmem>>, vector<1x32xf32>
    %33 = vector.broadcast %32 : vector<1x32xf32> to vector<8x32xf32>
    %34 = arith.addf %31, %33 : vector<8x32xf32>
    %c0_19 = arith.constant 0 : index
    %c0_20 = arith.constant 0 : index
    %c0_21 = arith.constant 0 : index
    %35 = vector.load %arg7[%c0_19, %c0_20, %c0_21] : memref<1x8x32xf32, #tpu.memory_space<vmem>>, vector<1x8x32xf32>
    %36 = vector.shape_cast %35 : vector<1x8x32xf32> to vector<8x32xf32>
    %37 = vector.shape_cast %34 : vector<8x32xf32> to vector<1x8x32xf32>
    tpu.vector_store %arg7[%c0_19, %c0_20, %c0_21], %37 {strides = array<i32>} : memref<1x8x32xf32, #tpu.memory_space<vmem>>, vector<1x8x32xf32>,
    return
  }
  func.func @transform_0(%arg0: i32) -> (i32, i32, i32) {
    %c0_i32 = arith.constant 0 : i32
    %c0_i32_0 = arith.constant 0 : i32
    %c0_i32_1 = arith.constant 0 : i32
    return %arg0, %c0_i32, %c0_i32_0 : i32, i32, i32
  }
  func.func @transform_1(%arg0: i32) -> (i32, i32) {
    %c0_i32 = arith.constant 0 : i32
    %c0_i32_0 = arith.constant 0 : i32
    %c0_i32_1 = arith.constant 0 : i32
    return %c0_i32, %c0_i32_0 : i32, i32
  }
  func.func @transform_2(%arg0: i32) -> (i32, i32) {
    %c0_i32 = arith.constant 0 : i32
    %c0_i32_0 = arith.constant 0 : i32
    %c0_i32_1 = arith.constant 0 : i32
    return %c0_i32, %c0_i32_0 : i32, i32
  }
  func.func @transform_3(%arg0: i32) -> (i32, i32) {
    %c0_i32 = arith.constant 0 : i32
    %c0_i32_0 = arith.constant 0 : i32
    %c0_i32_1 = arith.constant 0 : i32
    return %c0_i32, %c0_i32_0 : i32, i32
  }
  func.func @transform_4(%arg0: i32) -> (i32, i32) {
    %c0_i32 = arith.constant 0 : i32
    %c0_i32_0 = arith.constant 0 : i32
    %c0_i32_1 = arith.constant 0 : i32
    return %c0_i32, %c0_i32_0 : i32, i32
  }
  func.func @transform_5(%arg0: i32) -> (i32, i32) {
    %c0_i32 = arith.constant 0 : i32
    %c0_i32_0 = arith.constant 0 : i32
    %c0_i32_1 = arith.constant 0 : i32
    return %c0_i32, %c0_i32_0 : i32, i32
  }
  func.func @transform_6(%arg0: i32) -> (i32, i32, i32) {
    %c0_i32 = arith.constant 0 : i32
    %c0_i32_0 = arith.constant 0 : i32
    %c0_i32_1 = arith.constant 0 : i32
    return %arg0, %c0_i32, %c0_i32_0 : i32, i32, i32
  }
}

</mosaic_0001>

<llo_original>
// kernel: tpu_custom_call.1
$region0: #{tpu_custom_call.1}
  #allocation0 [shape = 'u32[]', space=smem, size = 0x4, offset = 0x4, fixed_abs, tag = 'smem constant byte address 0x4 - core index']
  #allocation1 [shape = 'u32[72,128]{1,0:T(1,128)}', space=vmem, size = 0x9000, scoped, tag = 'internal scratch']
  %s0 = inlined_call_operand.hbm [shape: f32[2,8,32], index: 0, kind: input, shape index: {}]
  %s1 = inlined_call_operand.hbm [shape: bf16[32,32], index: 1, kind: input, shape index: {}]
  %s2 = inlined_call_operand.hbm [shape: bf16[32,32], index: 2, kind: input, shape index: {}]
  %s3 = inlined_call_operand.hbm [shape: bf16[32,32], index: 3, kind: input, shape index: {}]
  %s4 = inlined_call_operand.hbm [shape: bf16[32,32], index: 4, kind: input, shape index: {}]
  %s5 = inlined_call_operand.vmem [shape: f32[1,32], index: 5, kind: input, shape index: {}]
  %s6 = inlined_call_operand.hbm [shape: f32[2,8,32], index: 6, kind: output, shape index: {}]
  %s7 = sld [smem:[#allocation0]]
  $region77: #{tpu_custom_call.1} parent=0
    _
  %s9 = ssub.s32 1, %s7
  %s10 = scalar_select 0, %s9, %s7
  $region1: #{tpu_custom_call.1} parent=0
    #allocation2 [shape = 'u8[8192]{0}', space=vmem, size = 0x2000, scoped, tag = 'input window, operand 0']
    #allocation3 [shape = 's32[2]{0}', space=sflag, size = 0x8, scoped, tag = 'scoped memory for tpu_custom_call.1']
    #allocation4 [shape = 's32[2]{0}', space=sflag, size = 0x8, scoped, tag = 'scoped memory for tpu_custom_call.1']
    #allocation5 [shape = 'u8[8192]{0}', space=vmem, size = 0x2000, scoped, tag = 'input window, operand 1, single buffered']
    #allocation6 [shape = 's32[1]{0}', space=sflag, size = 0x4, scoped, tag = 'scoped memory for tpu_custom_call.1']
    #allocation7 [shape = 'u8[8192]{0}', space=vmem, size = 0x2000, scoped, tag = 'input window, operand 2, single buffered']
    #allocation8 [shape = 'u8[8192]{0}', space=vmem, size = 0x2000, scoped, tag = 'input window, operand 3, single buffered']
    #allocation9 [shape = 's32[1]{0}', space=sflag, size = 0x4, scoped, tag = 'scoped memory for tpu_custom_call.1']
    #allocation10 [shape = 'u8[8192]{0}', space=vmem, size = 0x2000, scoped, tag = 'input window, operand 4, single buffered']
    #allocation11 [shape = 'u8[8192]{0}', space=vmem, size = 0x2000, scoped, tag = 'output window, operand 0']
    %11 = vsyncpa [#allocation3], 0
    %s12 = scalar_lea.sflag [#allocation3], 1
    %13 = vsyncpa %s12, 0
    %14 = vsyncpa [#allocation6], 0
    %15 = vsyncpa [#allocation9], 0
    %16 = vsyncpa [#allocation4], 0
    %s17 = scalar_lea.sflag [#allocation4], 1
    %18 = vsyncpa %s17, 0
    loop: start=0, step=1, limit=4
    $region2: #{tpu_custom_call.1} parent=1 // loop_pre_header
      _
    $region3: #{tpu_custom_call.1} parent=1 // loop_header
      %s20 = sphi 0, %s24
      %p21 = scmp.ge.s32.totalorder %s20, 4
      %s30 = sphi 0, %s32
      %s33 = sphi 0, %s30
      %s34 = sphi 0, %s33
      %s50 = sphi 0, %s34
      %s54 = sphi 0, %s54
      %s56 = sphi 0, %s54
      %s57 = sphi 0, %s56
      %s71 = sphi 0, %s57
      %s75 = sphi 0, %s75
      %s77 = sphi 0, %s75
      %s78 = sphi 0, %s77
      %s92 = sphi 0, %s78
      %s96 = sphi 0, %s96
      %s98 = sphi 0, %s96
      %s99 = sphi 0, %s98
      %s113 = sphi 0, %s99
      %s117 = sphi 0, %s117
      %s119 = sphi 0, %s117
      %s120 = sphi 0, %s119
      %s134 = sphi 0, %s120
      %s138 = sphi 0, %s138
      %s140 = sphi 0, %s138
      %s141 = sphi 0, %s140
      %s155 = sphi 0, %s141
      %s161 = sphi 0, %s163
      %s164 = sphi 0, %s161
      %s165 = sphi 0, %s164
      %s181 = sphi 0, %s165
    $region4: #{tpu_custom_call.1} parent=1 // loop_header_branch
      %23 = sbr.rel (%p21) target = $region8
    $region5: #{tpu_custom_call.1} parent=1 // loop_body
      %s25 = ssub.s32 %s20, 1
      %s26 = ssub.s32 %s20, 2
      %s27 = sadd.s32 %s20, 1
      %s28 = ssub.s32 %s20, %s27
      %p29 = scmp.eq.s32.totalorder %s28, 0
      %s31 = sadd.s32 %s30, 1
      %s32 = scalar_select %p29, %s30, %s31
      %p35 = pneg %p29
      %p36 = scmp.eq.s32.totalorder %s20, 1
      %p37 = por %p35, %p36
      %p38 = scmp.ne.s32.totalorder %s30, %s33
      %p39 = scmp.eq.s32.totalorder %s20, 0
      %p40 = por %p38, %p39
      %p41 = scmp.ne.s32.totalorder %s30, %s33
      %p42 = scmp.eq.s32.totalorder %s25, 1
      %p43 = por %p41, %p42
      %p44 = scmp.ne.s32.totalorder %s33, %s34
      %p45 = scmp.eq.s32.totalorder %s25, 0
      %p46 = por %p44, %p45
      %p47 = scmp.ne.s32.totalorder %s33, %s34
      %p48 = scmp.eq.s32.totalorder %s26, 1
      %p49 = por %p47, %p48
      %p51 = scmp.ne.s32.totalorder %s34, %s50
      %p52 = scmp.eq.s32.totalorder %s26, 0
      %p53 = por %p51, %p52
      %s55 = sadd.s32 %s54, 1
      %p58 = scmp.eq.s32.totalorder %s20, 1
      %p59 = scmp.ne.s32.totalorder %s54, %s56
      %p60 = scmp.eq.s32.totalorder %s20, 0
      %p61 = por %p59, %p60
      %p62 = scmp.ne.s32.totalorder %s54, %s56
      %p63 = scmp.eq.s32.totalorder %s25, 1
      %p64 = por %p62, %p63
      %p65 = scmp.ne.s32.totalorder %s56, %s57
      %p66 = scmp.eq.s32.totalorder %s25, 0
      %p67 = por %p65, %p66
      %p68 = scmp.ne.s32.totalorder %s56, %s57
      %p69 = scmp.eq.s32.totalorder %s26, 1
      %p70 = por %p68, %p69
      %p72 = scmp.ne.s32.totalorder %s57, %s71
      %p73 = scmp.eq.s32.totalorder %s26, 0
      %p74 = por %p72, %p73
      %s76 = sadd.s32 %s75, 1
      %p79 = scmp.eq.s32.totalorder %s20, 1
      %p80 = scmp.ne.s32.totalorder %s75, %s77
      %p81 = scmp.eq.s32.totalorder %s20, 0
      %p82 = por %p80, %p81
      %p83 = scmp.ne.s32.totalorder %s75, %s77
      %p84 = scmp.eq.s32.totalorder %s25, 1
      %p85 = por %p83, %p84
      %p86 = scmp.ne.s32.totalorder %s77, %s78
      %p87 = scmp.eq.s32.totalorder %s25, 0
      %p88 = por %p86, %p87
      %p89 = scmp.ne.s32.totalorder %s77, %s78
      %p90 = scmp.eq.s32.totalorder %s26, 1
      %p91 = por %p89, %p90
      %p93 = scmp.ne.s32.totalorder %s78, %s92
      %p94 = scmp.eq.s32.totalorder %s26, 0
      %p95 = por %p93, %p94
      %s97 = sadd.s32 %s96, 1
      %p100 = scmp.eq.s32.totalorder %s20, 1
      %p101 = scmp.ne.s32.totalorder %s96, %s98
      %p102 = scmp.eq.s32.totalorder %s20, 0
      %p103 = por %p101, %p102
      %p104 = scmp.ne.s32.totalorder %s96, %s98
      %p105 = scmp.eq.s32.totalorder %s25, 1
      %p106 = por %p104, %p105
      %p107 = scmp.ne.s32.totalorder %s98, %s99
      %p108 = scmp.eq.s32.totalorder %s25, 0
      %p109 = por %p107, %p108
      %p110 = scmp.ne.s32.totalorder %s98, %s99
      %p111 = scmp.eq.s32.totalorder %s26, 1
      %p112 = por %p110, %p111
      %p114 = scmp.ne.s32.totalorder %s99, %s113
      %p115 = scmp.eq.s32.totalorder %s26, 0
      %p116 = por %p114, %p115
      %s118 = sadd.s32 %s117, 1
      %p121 = scmp.eq.s32.totalorder %s20, 1
      %p122 = scmp.ne.s32.totalorder %s117, %s119
      %p123 = scmp.eq.s32.totalorder %s20, 0
      %p124 = por %p122, %p123
      %p125 = scmp.ne.s32.totalorder %s117, %s119
      %p126 = scmp.eq.s32.totalorder %s25, 1
      %p127 = por %p125, %p126
      %p128 = scmp.ne.s32.totalorder %s119, %s120
      %p129 = scmp.eq.s32.totalorder %s25, 0
      %p130 = por %p128, %p129
      %p131 = scmp.ne.s32.totalorder %s119, %s120
      %p132 = scmp.eq.s32.totalorder %s26, 1
      %p133 = por %p131, %p132
      %p135 = scmp.ne.s32.totalorder %s120, %s134
      %p136 = scmp.eq.s32.totalorder %s26, 0
      %p137 = por %p135, %p136
      %s139 = sadd.s32 %s138, 1
      %p142 = scmp.eq.s32.totalorder %s20, 1
      %p143 = scmp.ne.s32.totalorder %s138, %s140
      %p144 = scmp.eq.s32.totalorder %s20, 0
      %p145 = por %p143, %p144
      %p146 = scmp.ne.s32.totalorder %s138, %s140
      %p147 = scmp.eq.s32.totalorder %s25, 1
      %p148 = por %p146, %p147
      %p149 = scmp.ne.s32.totalorder %s140, %s141
      %p150 = scmp.eq.s32.totalorder %s25, 0
      %p151 = por %p149, %p150
      %p152 = scmp.ne.s32.totalorder %s140, %s141
      %p153 = scmp.eq.s32.totalorder %s26, 1
      %p154 = por %p152, %p153
      %p156 = scmp.ne.s32.totalorder %s141, %s155
      %p157 = scmp.eq.s32.totalorder %s26, 0
      %p158 = por %p156, %p157
      %s159 = ssub.s32 %s20, %s27
      %p160 = scmp.eq.s32.totalorder %s159, 0
      %s162 = sadd.s32 %s161, 1
      %s163 = scalar_select %p160, %s161, %s162
      %p166 = pneg %p160
      %p167 = scmp.eq.s32.totalorder %s20, 1
      %p168 = por %p166, %p167
      %p169 = scmp.ne.s32.totalorder %s161, %s164
      %p170 = scmp.eq.s32.totalorder %s20, 0
      %p171 = por %p169, %p170
      %p172 = scmp.ne.s32.totalorder %s161, %s164
      %p173 = scmp.eq.s32.totalorder %s25, 1
      %p174 = por %p172, %p173
      %p175 = scmp.ne.s32.totalorder %s164, %s165
      %p176 = scmp.eq.s32.totalorder %s25, 0
      %p177 = por %p175, %p176
      %p178 = scmp.ne.s32.totalorder %s164, %s165
      %p179 = scmp.eq.s32.totalorder %s26, 1
      %p180 = por %p178, %p179
      %p182 = scmp.ne.s32.totalorder %s165, %s181
      %p183 = scmp.eq.s32.totalorder %s26, 0
      %p184 = por %p182, %p183
      %p185 = scmp.le.s32.totalorder 1, %s20
      %p186 = scmp.lt.s32.totalorder %s20, 3
      %p187 = pnand %p185, %p186
      %p188 = pneg %p187
      // Predicated region
      $region9: #{tpu_custom_call.1} parent=5 // pred_check
        _
      $region10: #{tpu_custom_call.1} parent=5 // pred_check_branch
        %190 = sbr.rel (%p187) target = $region12
      $region11: #{tpu_custom_call.1} parent=5 // pred_region
        %s191 = ssub.s32 %s20, 1
        // Predicated region
        $region13: #{tpu_custom_call.1} parent=11 // pred_check
          %p192 = pneg %p67
        $region14: #{tpu_custom_call.1} parent=11 // pred_check_branch
          %194 = sbr.rel (%p192) target = $region16
        $region15: #{tpu_custom_call.1} parent=11 // pred_region
          %196 = vsyncadd [#allocation6], 0
          %s197 = sshll.u32 %s1, 4
          %s198 = int_to_ptr.hbm [resolvable:$true] %s197
          %s199 = sshll.u32 [#allocation5], 4
          %s200 = int_to_ptr.vmem [resolvable:$true] %s199
          %205 = dma.hbm_to_vmem [thread:$0]  %s198, 256, %s200, [#allocation6], 64, 64, 4
        $region16: #{tpu_custom_call.1} parent=11 // pred_fallthru
          _
        // Predicated region
        $region17: #{tpu_custom_call.1} parent=11 // pred_check
          %p206 = pneg %p88
        $region18: #{tpu_custom_call.1} parent=11 // pred_check_branch
          %208 = sbr.rel (%p206) target = $region20
        $region19: #{tpu_custom_call.1} parent=11 // pred_region
          %210 = vsyncadd [#allocation6], 0
          %s211 = sshll.u32 %s2, 4
          %s212 = int_to_ptr.hbm [resolvable:$true] %s211
          %s213 = sshll.u32 [#allocation7], 4
          %s214 = int_to_ptr.vmem [resolvable:$true] %s213
          %219 = dma.hbm_to_vmem [thread:$0]  %s212, 256, %s214, [#allocation6], 64, 64, 4
        $region20: #{tpu_custom_call.1} parent=11 // pred_fallthru
          _
        // Predicated region
        $region21: #{tpu_custom_call.1} parent=11 // pred_check
          %p220 = pneg %p109
        $region22: #{tpu_custom_call.1} parent=11 // pred_check_branch
          %222 = sbr.rel (%p220) target = $region24
        $region23: #{tpu_custom_call.1} parent=11 // pred_region
          %224 = vsyncadd [#allocation9], 0
          %s225 = sshll.u32 %s3, 4
          %s226 = int_to_ptr.hbm [resolvable:$true] %s225
          %s227 = sshll.u32 [#allocation8], 4
          %s228 = int_to_ptr.vmem [resolvable:$true] %s227
          %233 = dma.hbm_to_vmem [thread:$0]  %s226, 256, %s228, [#allocation9], 64, 64, 4
        $region24: #{tpu_custom_call.1} parent=11 // pred_fallthru
          _
        // Predicated region
        $region25: #{tpu_custom_call.1} parent=11 // pred_check
          %p234 = pneg %p130
        $region26: #{tpu_custom_call.1} parent=11 // pred_check_branch
          %236 = sbr.rel (%p234) target = $region28
        $region27: #{tpu_custom_call.1} parent=11 // pred_region
          %238 = vsyncadd [#allocation9], 0
          %s239 = sshll.u32 %s4, 4
          %s240 = int_to_ptr.hbm [resolvable:$true] %s239
          %s241 = sshll.u32 [#allocation10], 4
          %s242 = int_to_ptr.vmem [resolvable:$true] %s241
          %247 = dma.hbm_to_vmem [thread:$0]  %s240, 256, %s242, [#allocation9], 64, 64, 4
        $region28: #{tpu_custom_call.1} parent=11 // pred_fallthru
          _
        // Predicated region
        $region29: #{tpu_custom_call.1} parent=11 // pred_check
          %p248 = pneg %p151
        $region30: #{tpu_custom_call.1} parent=11 // pred_check_branch
          %250 = sbr.rel (%p248) target = $region32
        $region31: #{tpu_custom_call.1} parent=11 // pred_region
          _
        $region32: #{tpu_custom_call.1} parent=11 // pred_fallthru
          _
      $region12: #{tpu_custom_call.1} parent=5 // pred_fallthru
        _
      %p251 = scmp.lt.s32.totalorder %s20, 2
      // Predicated region
      $region33: #{tpu_custom_call.1} parent=5 // pred_check
        %p252 = pneg %p251
      $region34: #{tpu_custom_call.1} parent=5 // pred_check_branch
        %254 = sbr.rel (%p252) target = $region36
      $region35: #{tpu_custom_call.1} parent=5 // pred_region
        // Predicated region
        $region37: #{tpu_custom_call.1} parent=35 // pred_check
          %p255 = pneg %p40
        $region38: #{tpu_custom_call.1} parent=35 // pred_check_branch
          %257 = sbr.rel (%p255) target = $region40
        $region39: #{tpu_custom_call.1} parent=35 // pred_region
          %s258 = sand.u32 %s30, 1
          %s259 = scalar_lea.sflag [#allocation3], %s258
          %s260 = sand.u32 %s30, 1
          %s261 = smul.addr %s260, 8
          %s262 = scalar_lea.vmem [#allocation2], %s261
          %264 = vsyncadd %s259, 0
          %s265 = smul.addr %s20, 8
          %s266 = scalar_lea.hbm %s0, %s265
          %s268 = sshll.u32 %s266, 4
          %s269 = int_to_ptr.hbm [resolvable:$true] %s268
          %s270 = sshll.u32 %s262, 4
          %s271 = int_to_ptr.vmem [resolvable:$true] %s270
          %273 = dma.hbm_to_vmem [thread:$0]  %s269, 128, %s271, %s259
        $region40: #{tpu_custom_call.1} parent=35 // pred_fallthru
          _
      $region36: #{tpu_custom_call.1} parent=5 // pred_fallthru
        _
      %p274 = scmp.le.s32.totalorder 1, %s20
      %p275 = scmp.lt.s32.totalorder %s20, 3
      %p276 = pnand %p274, %p275
      %p277 = pneg %p276
      // Predicated region
      $region41: #{tpu_custom_call.1} parent=5 // pred_check
        _
      $region42: #{tpu_custom_call.1} parent=5 // pred_check_branch
        %279 = sbr.rel (%p276) target = $region44
      $region43: #{tpu_custom_call.1} parent=5 // pred_region
        %s280 = ssub.s32 %s20, 1
        %s281 = sand.u32 %s33, 1
        %s282 = scalar_lea.sflag [#allocation3], %s281
        %s283 = sand.u32 %s33, 1
        %s284 = smul.addr %s283, 8
        %s285 = scalar_lea.vmem [#allocation2], %s284
        // Predicated region
        $region45: #{tpu_custom_call.1} parent=43 // pred_check
          %p286 = pneg %p46
        $region46: #{tpu_custom_call.1} parent=43 // pred_check_branch
          %288 = sbr.rel (%p286) target = $region48
        $region47: #{tpu_custom_call.1} parent=43 // pred_region
          %290 = dma.done %s282, 128
        $region48: #{tpu_custom_call.1} parent=43 // pred_fallthru
          _
        // Predicated region
        $region49: #{tpu_custom_call.1} parent=43 // pred_check
          %p291 = pneg %p67
        $region50: #{tpu_custom_call.1} parent=43 // pred_check_branch
          %293 = sbr.rel (%p291) target = $region52
        $region51: #{tpu_custom_call.1} parent=43 // pred_region
          %295 = dma.done [#allocation6], 256
        $region52: #{tpu_custom_call.1} parent=43 // pred_fallthru
          _
        // Predicated region
        $region53: #{tpu_custom_call.1} parent=43 // pred_check
          %p296 = pneg %p88
        $region54: #{tpu_custom_call.1} parent=43 // pred_check_branch
          %298 = sbr.rel (%p296) target = $region56
        $region55: #{tpu_custom_call.1} parent=43 // pred_region
          %300 = dma.done [#allocation6], 256
        $region56: #{tpu_custom_call.1} parent=43 // pred_fallthru
          _
        // Predicated region
        $region57: #{tpu_custom_call.1} parent=43 // pred_check
          %p301 = pneg %p109
        $region58: #{tpu_custom_call.1} parent=43 // pred_check_branch
          %303 = sbr.rel (%p301) target = $region60
        $region59: #{tpu_custom_call.1} parent=43 // pred_region
          %305 = dma.done [#allocation9], 256
        $region60: #{tpu_custom_call.1} parent=43 // pred_fallthru
          _
        // Predicated region
        $region61: #{tpu_custom_call.1} parent=43 // pred_check
          %p306 = pneg %p130
        $region62: #{tpu_custom_call.1} parent=43 // pred_check_branch
          %308 = sbr.rel (%p306) target = $region64
        $region63: #{tpu_custom_call.1} parent=43 // pred_region
          %310 = dma.done [#allocation9], 256
        $region64: #{tpu_custom_call.1} parent=43 // pred_fallthru
          _
        %s311 = sand.u32 %s33, 1
        %s312 = scalar_lea.sflag [#allocation3], %s311
        %s313 = sand.u32 %s33, 1
        %s314 = smul.addr %s313, 8
        %s315 = scalar_lea.vmem [#allocation2], %s314
        %p316 = pneg %p46
        %p317 = pneg %p43
        %p318 = pneg %p67
        %p319 = pneg %p64
        %p320 = pneg %p88
        %p321 = pneg %p85
        %p322 = pneg %p109
        %p323 = pneg %p106
        %p324 = pneg %p130
        %p325 = pneg %p127
        %p326 = pneg %p151
        %p327 = pneg %p148
        %p328 = pneg %p177
        %p329 = pneg %p174
        %s330 = sand.u32 %s164, 1
        %s331 = scalar_lea.sflag [#allocation4], %s330
        %s332 = sand.u32 %s164, 1
        %s333 = smul.addr %s332, 8
        %s334 = scalar_lea.vmem [#allocation11], %s333
        %v336 = vld [vmem:[%s285] sm:$0xff]
        %v337 = vpack.c.bf16 %v336, %v336
        %v338 = vld [vmem:[#allocation5] sm:$0xf]
        %v339 = vld [vmem:[#allocation5 + $0x4] sm:$0xf]
        %v340 = vld [vmem:[#allocation5 + $0x8] sm:$0xf]
        %v341 = vld [vmem:[#allocation5 + $0xc] sm:$0xf]
        %v346 = vunpack.c.l.b16 %v338
        %v347 = vunpack.c.l.b16 %v339
        %v348 = vunpack.c.l.b16 %v340
        %v349 = vunpack.c.l.b16 %v341
        %v350 = vpack.c.b16 %v347, %v346
        %v351 = vpack.c.b16 %v349, %v348
        %vm352 = vcmask 261120
        %v354 = vsel %vm352, %v350, 0
        %v357 = vsel %vm352, %v351, 0
        %v360 = vsel %vm352, %v337, 0
        %362 = vmatpush.bf16.xpose.msra.mxu0 0
        %363 = vmatpush.bf16.xpose.msra.mxu0 0
        %364 = vmatpush.bf16.xpose.msra.mxu0 0
        %365 = vmatpush.bf16.xpose.msra.mxu0 0
        %366 = vmatpush.bf16.xpose.msra.mxu0 0
        %367 = vmatpush.bf16.xpose.msra.mxu0 0
        %368 = vmatpush.bf16.xpose.msra.mxu0 0
        %369 = vmatpush.bf16.xpose.msra.mxu0 %v360
        %370 = vmatmul.bf16.gmra.mxu0 %v354
        %v371 = vpop.f32.mrf.mxu0
        %v372 = vadd.f32 0.0, %v371
        %v373 = vpop.f32.mrf.mxu0
        %v374 = vadd.f32 0.0, %v373
        %375 = vmatmul.bf16.gmra.mxu0 %v357
        %v376 = vpop.f32.mrf.mxu0
        %v377 = vadd.f32 0.0, %v376
        %v378 = vpop.f32.mrf.mxu0
        %v379 = vadd.f32 0.0, %v378
        %380 = vdwg.mxu0
        %v381 = vld [vmem:[#allocation7] sm:$0xf]
        %v382 = vld [vmem:[#allocation7 + $0x4] sm:$0xf]
        %v383 = vld [vmem:[#allocation7 + $0x8] sm:$0xf]
        %v384 = vld [vmem:[#allocation7 + $0xc] sm:$0xf]
        %v389 = vunpack.c.l.b16 %v381
        %v390 = vunpack.c.l.b16 %v382
        %v391 = vunpack.c.l.b16 %v383
        %v392 = vunpack.c.l.b16 %v384
        %v393 = vpack.c.b16 %v390, %v389
        %v394 = vpack.c.b16 %v392, %v391
        %v396 = vsel %vm352, %v393, 0
        %v399 = vsel %vm352, %v394, 0
        %401 = vmatpush.bf16.xpose.msra.mxu0 0
        %402 = vmatpush.bf16.xpose.msra.mxu0 0
        %403 = vmatpush.bf16.xpose.msra.mxu0 0
        %404 = vmatpush.bf16.xpose.msra.mxu0 0
        %405 = vmatpush.bf16.xpose.msra.mxu0 0
        %406 = vmatpush.bf16.xpose.msra.mxu0 0
        %407 = vmatpush.bf16.xpose.msra.mxu0 0
        %408 = vmatpush.bf16.xpose.msra.mxu0 %v360
        %409 = vmatmul.bf16.gmra.mxu0 %v396
        %v410 = vpop.f32.mrf.mxu0
        %v411 = vadd.f32 0.0, %v410
        %v412 = vpop.f32.mrf.mxu0
        %v413 = vadd.f32 0.0, %v412
        %414 = vmatmul.bf16.gmra.mxu0 %v399
        %v415 = vpop.f32.mrf.mxu0
        %v416 = vadd.f32 0.0, %v415
        %v417 = vpop.f32.mrf.mxu0
        %v418 = vadd.f32 0.0, %v417
        %419 = vdwg.mxu0
        %v420 = vld [vmem:[#allocation8] sm:$0xf]
        %v421 = vld [vmem:[#allocation8 + $0x4] sm:$0xf]
        %v422 = vld [vmem:[#allocation8 + $0x8] sm:$0xf]
        %v423 = vld [vmem:[#allocation8 + $0xc] sm:$0xf]
        %v428 = vunpack.c.l.b16 %v420
        %v429 = vunpack.c.l.b16 %v421
        %v430 = vunpack.c.l.b16 %v422
        %v431 = vunpack.c.l.b16 %v423
        %v432 = vpack.c.b16 %v429, %v428
        %v433 = vpack.c.b16 %v431, %v430
        %v435 = vsel %vm352, %v432, 0
        %v438 = vsel %vm352, %v433, 0
        %440 = vmatpush.bf16.xpose.msra.mxu0 0
        %441 = vmatpush.bf16.xpose.msra.mxu0 0
        %442 = vmatpush.bf16.xpose.msra.mxu0 0
        %443 = vmatpush.bf16.xpose.msra.mxu0 0
        %444 = vmatpush.bf16.xpose.msra.mxu0 0
        %445 = vmatpush.bf16.xpose.msra.mxu0 0
        %446 = vmatpush.bf16.xpose.msra.mxu0 0
        %447 = vmatpush.bf16.xpose.msra.mxu0 %v360
        %448 = vmatmul.bf16.gmra.mxu0 %v435
        %v449 = vpop.f32.mrf.mxu0
        %v450 = vadd.f32 0.0, %v449
        %v451 = vpop.f32.mrf.mxu0
        %v452 = vadd.f32 0.0, %v451
        %453 = vmatmul.bf16.gmra.mxu0 %v438
        %v454 = vpop.f32.mrf.mxu0
        %v455 = vadd.f32 0.0, %v454
        %v456 = vpop.f32.mrf.mxu0
        %v457 = vadd.f32 0.0, %v456
        %458 = vdwg.mxu0
        %v459 = vpack.c.bf16 %v372, %v372
        %v460 = vpack.c.bf16 %v374, %v374
        %v461 = vpack.c.bf16 %v377, %v377
        %v462 = vpack.c.bf16 %v379, %v379
        %v463 = vpack.c.bf16 %v411, %v411
        %v464 = vpack.c.bf16 %v413, %v413
        %v465 = vpack.c.bf16 %v416, %v416
        %v466 = vpack.c.bf16 %v418, %v418
        %v467 = vpack.c.bf16 %v450, %v450
        %v468 = vpack.c.bf16 %v452, %v452
        %v469 = vpack.c.bf16 %v455, %v455
        %v470 = vpack.c.bf16 %v457, %v457
        %471 = vxpose.xlu0.c.b16.start [1/8] %v459, 128
        %472 = vxpose.xlu0.c.b16.cont [2/8] 0, 128
        %473 = vxpose.xlu0.c.b16.cont [3/8] 0, 128
        %474 = vxpose.xlu0.c.b16.cont [4/8] 0, 128
        %475 = vxpose.xlu0.c.b16.cont [5/8] 0, 128
        %476 = vxpose.xlu0.c.b16.cont [6/8] 0, 128
        %477 = vxpose.xlu0.c.b16.cont [7/8] 0, 128
        %478 = vxpose.xlu0.c.b16.end [8/8] 0, 128
        %v479 = vpop.trf.xlu0
        %v480 = vpop.trf.xlu0
        %v481 = vpop.trf.xlu0
        %v482 = vpop.trf.xlu0
        %v483 = vpop.trf.xlu0
        %v484 = vpop.trf.xlu0
        %v485 = vpop.trf.xlu0
        %v486 = vpop.trf.xlu0
        %vm487 = vcmask 64512
        %v489 = vsel %vm487, %v479, 0
        %vm491 = vcmask 1043456
        %v493 = vsel %vm491, %v463, 0
        %495 = vmatpush.bf16.msra.mxu0 0
        %496 = vmatpush.bf16.msra.mxu0 0
        %497 = vmatpush.bf16.msra.mxu0 0
        %498 = vmatpush.bf16.msra.mxu0 0
        %499 = vmatpush.bf16.msra.mxu0 0
        %500 = vmatpush.bf16.msra.mxu0 0
        %501 = vmatpush.bf16.msra.mxu0 0
        %502 = vmatpush.bf16.msra.mxu0 %v493
        %503 = vmatmul.bf16.gmra.mxu0 %v489
        %v504 = vpop.f32.mrf.mxu0
        %v505 = vadd.f32 0.0, %v504
        %v506 = vpop.f32.mrf.mxu0
        %507 = vdwg.mxu0
        %508 = vxpose.xlu0.c.b16.start [1/8] %v460, 128
        %509 = vxpose.xlu0.c.b16.cont [2/8] 0, 128
        %510 = vxpose.xlu0.c.b16.cont [3/8] 0, 128
        %511 = vxpose.xlu0.c.b16.cont [4/8] 0, 128
        %512 = vxpose.xlu0.c.b16.cont [5/8] 0, 128
        %513 = vxpose.xlu0.c.b16.cont [6/8] 0, 128
        %514 = vxpose.xlu0.c.b16.cont [7/8] 0, 128
        %515 = vxpose.xlu0.c.b16.end [8/8] 0, 128
        %v516 = vpop.trf.xlu0
        %v517 = vpop.trf.xlu0
        %v518 = vpop.trf.xlu0
        %v519 = vpop.trf.xlu0
        %v520 = vpop.trf.xlu0
        %v521 = vpop.trf.xlu0
        %v522 = vpop.trf.xlu0
        %v523 = vpop.trf.xlu0
        %v525 = vsel %vm487, %v516, 0
        %v528 = vsel %vm491, %v464, 0
        %530 = vmatpush.bf16.msra.mxu0 0
        %531 = vmatpush.bf16.msra.mxu0 0
        %532 = vmatpush.bf16.msra.mxu0 0
        %533 = vmatpush.bf16.msra.mxu0 0
        %534 = vmatpush.bf16.msra.mxu0 0
        %535 = vmatpush.bf16.msra.mxu0 0
        %536 = vmatpush.bf16.msra.mxu0 0
        %537 = vmatpush.bf16.msra.mxu0 %v528
        %538 = vmatmul.bf16.gmra.mxu0 %v525
        %v539 = vpop.f32.mrf.mxu0
        %v540 = vadd.f32 0.0, %v539
        %v541 = vpop.f32.mrf.mxu0
        %542 = vdwg.mxu0
        %543 = vxpose.xlu0.c.b16.start [1/8] %v461, 128
        %544 = vxpose.xlu0.c.b16.cont [2/8] 0, 128
        %545 = vxpose.xlu0.c.b16.cont [3/8] 0, 128
        %546 = vxpose.xlu0.c.b16.cont [4/8] 0, 128
        %547 = vxpose.xlu0.c.b16.cont [5/8] 0, 128
        %548 = vxpose.xlu0.c.b16.cont [6/8] 0, 128
        %549 = vxpose.xlu0.c.b16.cont [7/8] 0, 128
        %550 = vxpose.xlu0.c.b16.end [8/8] 0, 128
        %v551 = vpop.trf.xlu0
        %v552 = vpop.trf.xlu0
        %v553 = vpop.trf.xlu0
        %v554 = vpop.trf.xlu0
        %v555 = vpop.trf.xlu0
        %v556 = vpop.trf.xlu0
        %v557 = vpop.trf.xlu0
        %v558 = vpop.trf.xlu0
        %v560 = vsel %vm487, %v551, 0
        %v563 = vsel %vm491, %v465, 0
        %565 = vmatpush.bf16.msra.mxu0 0
        %566 = vmatpush.bf16.msra.mxu0 0
        %567 = vmatpush.bf16.msra.mxu0 0
        %568 = vmatpush.bf16.msra.mxu0 0
        %569 = vmatpush.bf16.msra.mxu0 0
        %570 = vmatpush.bf16.msra.mxu0 0
        %571 = vmatpush.bf16.msra.mxu0 0
        %572 = vmatpush.bf16.msra.mxu0 %v563
        %573 = vmatmul.bf16.gmra.mxu0 %v560
        %v574 = vpop.f32.mrf.mxu0
        %v575 = vadd.f32 0.0, %v574
        %v576 = vpop.f32.mrf.mxu0
        %577 = vdwg.mxu0
        %578 = vxpose.xlu0.c.b16.start [1/8] %v462, 128
        %579 = vxpose.xlu0.c.b16.cont [2/8] 0, 128
        %580 = vxpose.xlu0.c.b16.cont [3/8] 0, 128
        %581 = vxpose.xlu0.c.b16.cont [4/8] 0, 128
        %582 = vxpose.xlu0.c.b16.cont [5/8] 0, 128
        %583 = vxpose.xlu0.c.b16.cont [6/8] 0, 128
        %584 = vxpose.xlu0.c.b16.cont [7/8] 0, 128
        %585 = vxpose.xlu0.c.b16.end [8/8] 0, 128
        %v586 = vpop.trf.xlu0
        %v587 = vpop.trf.xlu0
        %v588 = vpop.trf.xlu0
        %v589 = vpop.trf.xlu0
        %v590 = vpop.trf.xlu0
        %v591 = vpop.trf.xlu0
        %v592 = vpop.trf.xlu0
        %v593 = vpop.trf.xlu0
        %v595 = vsel %vm487, %v586, 0
        %v598 = vsel %vm491, %v466, 0
        %600 = vmatpush.bf16.msra.mxu0 0
        %601 = vmatpush.bf16.msra.mxu0 0
        %602 = vmatpush.bf16.msra.mxu0 0
        %603 = vmatpush.bf16.msra.mxu0 0
        %604 = vmatpush.bf16.msra.mxu0 0
        %605 = vmatpush.bf16.msra.mxu0 0
        %606 = vmatpush.bf16.msra.mxu0 0
        %607 = vmatpush.bf16.msra.mxu0 %v598
        %608 = vmatmul.bf16.gmra.mxu0 %v595
        %v609 = vpop.f32.mrf.mxu0
        %v610 = vadd.f32 0.0, %v609
        %v611 = vpop.f32.mrf.mxu0
        %612 = vdwg.mxu0
        %v613 = vsel %vm487, %v505, -inf
        %614 = vmax.xlane.f32.xlu0 %v613
        %v615 = vpop.xlane.xlu0 %614
        %v616 = vsel %vm487, %v540, -inf
        %617 = vmax.xlane.f32.xlu0 %v616
        %v618 = vpop.xlane.xlu0 %617
        %v619 = vsel %vm487, %v575, -inf
        %620 = vmax.xlane.f32.xlu0 %v619
        %v621 = vpop.xlane.xlu0 %620
        %v622 = vsel %vm487, %v610, -inf
        %623 = vmax.xlane.f32.xlu0 %v622
        %v624 = vpop.xlane.xlu0 %623
        %v625 = vsub.f32 %v505, %v615
        %v626 = vsub.f32 %v540, %v618
        %v627 = vsub.f32 %v575, %v621
        %v628 = vsub.f32 %v610, %v624
        %v629 = vmul.f32 %v625, 1.442695
        %v630 = vpow.pop %v629
        %v631 = vmul.f32 %v626, 1.442695
        %v632 = vpow.pop %v631
        %v633 = vmul.f32 %v627, 1.442695
        %v634 = vpow.pop %v633
        %v635 = vmul.f32 %v628, 1.442695
        %v636 = vpow.pop %v635
        %v637 = vsel %vm487, %v630, 0.0
        %638 = vadd.xlane.f32.xlu0 %v637
        %v639 = vpop.xlane.xlu0 %638
        %v640 = vsel %vm487, %v632, 0.0
        %641 = vadd.xlane.f32.xlu0 %v640
        %v642 = vpop.xlane.xlu0 %641
        %v643 = vsel %vm487, %v634, 0.0
        %644 = vadd.xlane.f32.xlu0 %v643
        %v645 = vpop.xlane.xlu0 %644
        %v646 = vsel %vm487, %v636, 0.0
        %647 = vadd.xlane.f32.xlu0 %v646
        %v648 = vpop.xlane.xlu0 %647
        %v649 = vrcp.pop %v639
        %v650 = vrcp.pop %v642
        %v651 = vrcp.pop %v645
        %v652 = vrcp.pop %v648
        %v653 = vmul.f32 %v630, %v649
        %v654 = vmul.f32 %v632, %v650
        %v655 = vmul.f32 %v634, %v651
        %v656 = vmul.f32 %v636, %v652
        %v657 = vpack.c.bf16 %v653, %v653
        %v658 = vpack.c.bf16 %v654, %v654
        %v659 = vpack.c.bf16 %v655, %v655
        %v660 = vpack.c.bf16 %v656, %v656
        %v662 = vsel %vm487, %v467, 0
        %v665 = vsel %vm487, %v657, 0
        %667 = vmatpush.bf16.xpose.msra.mxu0 0
        %668 = vmatpush.bf16.xpose.msra.mxu0 0
        %669 = vmatpush.bf16.xpose.msra.mxu0 0
        %670 = vmatpush.bf16.xpose.msra.mxu0 0
        %671 = vmatpush.bf16.xpose.msra.mxu0 0
        %672 = vmatpush.bf16.xpose.msra.mxu0 0
        %673 = vmatpush.bf16.xpose.msra.mxu0 0
        %674 = vmatpush.bf16.xpose.msra.mxu0 %v665
        %675 = vmatmul.bf16.gmra.mxu0 %v662
        %v676 = vpop.f32.mrf.mxu0
        %v677 = vadd.f32 0.0, %v676
        %v678 = vpop.f32.mrf.mxu0
        %679 = vdwg.mxu0
        %v681 = vsel %vm487, %v468, 0
        %v684 = vsel %vm487, %v658, 0
        %686 = vmatpush.bf16.xpose.msra.mxu0 0
        %687 = vmatpush.bf16.xpose.msra.mxu0 0
        %688 = vmatpush.bf16.xpose.msra.mxu0 0
        %689 = vmatpush.bf16.xpose.msra.mxu0 0
        %690 = vmatpush.bf16.xpose.msra.mxu0 0
        %691 = vmatpush.bf16.xpose.msra.mxu0 0
        %692 = vmatpush.bf16.xpose.msra.mxu0 0
        %693 = vmatpush.bf16.xpose.msra.mxu0 %v684
        %694 = vmatmul.bf16.gmra.mxu0 %v681
        %v695 = vpop.f32.mrf.mxu0
        %v696 = vadd.f32 0.0, %v695
        %v697 = vpop.f32.mrf.mxu0
        %698 = vdwg.mxu0
        %v700 = vsel %vm487, %v469, 0
        %v703 = vsel %vm487, %v659, 0
        %705 = vmatpush.bf16.xpose.msra.mxu0 0
        %706 = vmatpush.bf16.xpose.msra.mxu0 0
        %707 = vmatpush.bf16.xpose.msra.mxu0 0
        %708 = vmatpush.bf16.xpose.msra.mxu0 0
        %709 = vmatpush.bf16.xpose.msra.mxu0 0
        %710 = vmatpush.bf16.xpose.msra.mxu0 0
        %711 = vmatpush.bf16.xpose.msra.mxu0 0
        %712 = vmatpush.bf16.xpose.msra.mxu0 %v703
        %713 = vmatmul.bf16.gmra.mxu0 %v700
        %v714 = vpop.f32.mrf.mxu0
        %v715 = vadd.f32 0.0, %v714
        %v716 = vpop.f32.mrf.mxu0
        %717 = vdwg.mxu0
        %v719 = vsel %vm487, %v470, 0
        %v722 = vsel %vm487, %v660, 0
        %724 = vmatpush.bf16.xpose.msra.mxu0 0
        %725 = vmatpush.bf16.xpose.msra.mxu0 0
        %726 = vmatpush.bf16.xpose.msra.mxu0 0
        %727 = vmatpush.bf16.xpose.msra.mxu0 0
        %728 = vmatpush.bf16.xpose.msra.mxu0 0
        %729 = vmatpush.bf16.xpose.msra.mxu0 0
        %730 = vmatpush.bf16.xpose.msra.mxu0 0
        %731 = vmatpush.bf16.xpose.msra.mxu0 %v722
        %732 = vmatmul.bf16.gmra.mxu0 %v719
        %v733 = vpop.f32.mrf.mxu0
        %v734 = vadd.f32 0.0, %v733
        %v735 = vpop.f32.mrf.mxu0
        %736 = vdwg.mxu0
        %v737 = vpack.c.bf16 %v696, %v677
        %v738 = vpack.c.bf16 %v734, %v715
        %v739 = vld [vmem:[#allocation10] sm:$0xf]
        %v740 = vld [vmem:[#allocation10 + $0x4] sm:$0xf]
        %v741 = vld [vmem:[#allocation10 + $0x8] sm:$0xf]
        %v742 = vld [vmem:[#allocation10 + $0xc] sm:$0xf]
        %v743 = vld [vmem:[%s5] sm:$0x1]
        %v745 = vperm.slane %v743, 0
        %747 = vxpose.xlu0.c.b16.start [1/8] %v737, 128
        %748 = vxpose.xlu0.c.b16.cont [2/8] %v738, 128
        %749 = vxpose.xlu0.c.b16.cont [3/8] 0, 128
        %750 = vxpose.xlu0.c.b16.cont [4/8] 0, 128
        %751 = vxpose.xlu0.c.b16.cont [5/8] 0, 128
        %752 = vxpose.xlu0.c.b16.cont [6/8] 0, 128
        %753 = vxpose.xlu0.c.b16.cont [7/8] 0, 128
        %754 = vxpose.xlu0.c.b16.end [8/8] 0, 128
        %v755 = vpop.trf.xlu0
        %v756 = vpop.trf.xlu0
        %v757 = vpop.trf.xlu0
        %v758 = vpop.trf.xlu0
        %v759 = vpop.trf.xlu0
        %v760 = vpop.trf.xlu0
        %v761 = vpop.trf.xlu0
        %v762 = vpop.trf.xlu0
        %v767 = vunpack.c.l.b16 %v739
        %v768 = vunpack.c.l.b16 %v740
        %v769 = vunpack.c.l.b16 %v741
        %v770 = vunpack.c.l.b16 %v742
        %v771 = vpack.c.b16 %v768, %v767
        %v772 = vpack.c.b16 %v770, %v769
        %v776 = vsel %vm352, %v755, 0
        %778 = vmatpush.bf16.msra.mxu0 0
        %779 = vmatpush.bf16.msra.mxu0 0
        %780 = vmatpush.bf16.msra.mxu0 0
        %781 = vmatpush.bf16.msra.mxu0 0
        %782 = vmatpush.bf16.msra.mxu0 0
        %783 = vmatpush.bf16.msra.mxu0 0
        %784 = vmatpush.bf16.msra.mxu0 %v772
        %785 = vmatpush.bf16.msra.mxu0 %v771
        %786 = vmatmul.bf16.gmra.mxu0 %v776
        %v787 = vpop.f32.mrf.mxu0
        %v788 = vadd.f32 %v745, %v787
        %v789 = vpop.f32.mrf.mxu0
        %790 = vdwg.mxu0
        %791 = vst.msk [vmem:[%s334] sm:$0xff] %vm352, %v788
        %s792 = sand.u32 %s164, 1
        %s793 = scalar_lea.sflag [#allocation4], %s792
        %s794 = sand.u32 %s164, 1
        %s795 = smul.addr %s794, 8
        %s796 = scalar_lea.vmem [#allocation11], %s795
        // Predicated region
        $region65: #{tpu_custom_call.1} parent=43 // pred_check
          %p797 = pneg %p174
        $region66: #{tpu_custom_call.1} parent=43 // pred_check_branch
          %799 = sbr.rel (%p797) target = $region68
        $region67: #{tpu_custom_call.1} parent=43 // pred_region
          %801 = vsyncadd %s793, 0
          %s802 = smul.addr %s25, 8
          %s803 = scalar_lea.hbm %s6, %s802
          %s805 = sshll.u32 %s796, 4
          %s806 = int_to_ptr.vmem [resolvable:$true] %s805
          %s807 = sshll.u32 %s803, 4
          %s808 = int_to_ptr.hbm [resolvable:$true] %s807
          %810 = dma.vmem_to_hbm [thread:$0]  %s806, 128, %s808, %s793
        $region68: #{tpu_custom_call.1} parent=43 // pred_fallthru
          _
      $region44: #{tpu_custom_call.1} parent=5 // pred_fallthru
        _
      %p811 = scmp.le.s32.totalorder 2, %s20
      // Predicated region
      $region69: #{tpu_custom_call.1} parent=5 // pred_check
        %p812 = pneg %p811
      $region70: #{tpu_custom_call.1} parent=5 // pred_check_branch
        %814 = sbr.rel (%p812) target = $region72
      $region71: #{tpu_custom_call.1} parent=5 // pred_region
        %s815 = ssub.s32 %s20, 2
        // Predicated region
        $region73: #{tpu_custom_call.1} parent=71 // pred_check
          %p816 = pneg %p180
        $region74: #{tpu_custom_call.1} parent=71 // pred_check_branch
          %818 = sbr.rel (%p816) target = $region76
        $region75: #{tpu_custom_call.1} parent=71 // pred_region
          %s819 = sand.u32 %s165, 1
          %s820 = scalar_lea.sflag [#allocation4], %s819
          %s821 = sand.u32 %s165, 1
          %s822 = smul.addr %s821, 8
          %s823 = scalar_lea.vmem [#allocation11], %s822
          %825 = dma.done %s820, 128
        $region76: #{tpu_custom_call.1} parent=71 // pred_fallthru
          _
      $region72: #{tpu_custom_call.1} parent=5 // pred_fallthru
        _
    $region6: #{tpu_custom_call.1} parent=1 // loop_footer
      %s24 = sadd.s32 1, %s20
    $region7: #{tpu_custom_call.1} parent=1 // loop_footer_branch
      %19 = sbr.rel target = $region3
    $region8: #{tpu_custom_call.1} parent=1 // loop_exit
      _
    %826 = vsyncpa [#allocation3], 1
    %s827 = scalar_lea.sflag [#allocation3], 1
    %828 = vsyncpa %s827, 1
    %829 = vsyncpa [#allocation6], 1
    %830 = vsyncpa [#allocation9], 1
    %831 = vsyncpa [#allocation4], 1
    %s832 = scalar_lea.sflag [#allocation4], 1
    %833 = vsyncpa %s832, 1

</llo_original>
